<compile_context>
chip_gen: v5e
topology: v5e:2x2
jax: 0.10.0
libtpu: 0.0.40
codegen_flags: <defaults>
</compile_context>

<pallas_src>
import functools

import jax
import jax.numpy as jnp
from jax.experimental import pallas as pl
from jax.experimental.pallas import tpu as pltpu


def _round_up(x, m):
    return ((x + m - 1) // m) * m


def _cdiv(a, b):
    return -(-a // b)


def _sublane(dtype):
    # bf16 vregs pack 16 sublanes; f32 packs 8.
    return 16 if jnp.dtype(dtype).itemsize == 2 else 8


def _vmem_limit_bytes():
    """Generation-aware VMEM limit: ~85% of physical (≈108 MiB on v5e/v6e,
    ≈54 MiB on v7x). Falls back to a value that is safe on every generation."""
    try:
        cap = pltpu.get_tpu_info().vmem_capacity_bytes
        return min(max(int(cap * 0.85), 32 * 1024 * 1024), 112 * 1024 * 1024)
    except Exception:
        return 56 * 1024 * 1024


def _batch_tiling(B, block_batch, align):
    """Balanced batch tiles: avoid last-tile padding waste and aim for >=2 tiles
    so the 'parallel' batch axis can shard across both v7x TensorCores."""
    nt = _cdiv(B, block_batch)
    if nt == 1 and B >= 2 * align:
        nt = 2
    tb = _round_up(_cdiv(B, nt), align)
    return tb, nt * tb


def _hidden_tiling(H, block_hidden):
    """Balanced hidden-dim tiles, each a multiple of 128 lanes."""
    nt = _cdiv(_round_up(H, 128), block_hidden)
    th = _round_up(_cdiv(H, nt), 128)
    return th, nt * th


def _pad2d(a, rows, cols, dtype):
    """Zero-pad (and cast) a 1-D/2-D array to (rows, cols); no-op when aligned."""
    if a.ndim == 1:
        a = a[None, :]
    if a.shape == (rows, cols) and a.dtype == jnp.dtype(dtype):
        return a
    out = jnp.zeros((rows, cols), dtype)
    return out.at[: a.shape[0], : a.shape[1]].set(a.astype(dtype))


def _mlp_kernel(x_ref, w1_ref, b1_ref, w2_ref, b2_ref, o_ref, acc_ref, *,
                apply_softmax):
    k = pl.program_id(1)

    @pl.when(k == 0)
    def _init():
        acc_ref[...] = jnp.zeros_like(acc_ref)

    # fc1 H-slice: (TB, D_in) @ (D_in, TH) -> f32 acc; bias + ReLU on the VPU.
    h = jnp.dot(x_ref[...], w1_ref[...], preferred_element_type=jnp.float32)
    h = jnp.maximum(h + b1_ref[...], 0.0)
    # fc2 partial product: accumulate (TB, TH) @ (TH, D_out) into f32 scratch.
    acc_ref[...] += jnp.dot(h.astype(w2_ref.dtype), w2_ref[...],
                            preferred_element_type=jnp.float32)

    @pl.when(k == pl.num_programs(1) - 1)
    def _finalize():
        out = acc_ref[...] + b2_ref[...]
        if apply_softmax:
            # Padded logit lanes carry b2 = -1e30 (set in the wrapper), so they
            # vanish under exp() — no in-kernel iota/select mask needed.
            m = jnp.max(out, axis=-1, keepdims=True)
            e = jnp.exp(out - m)
            # approx reciprocal (EUP slot): rows sum to 1 within ~1e-3 rel. error.
            out = e * pl.reciprocal(jnp.sum(e, axis=-1, keepdims=True), approx=True)
        o_ref[...] = out.astype(o_ref.dtype)


def _mlp_pallas(x_p, w1_p, b1_p, w2_p, b2_p, *, tb, th, apply_softmax,
                out_dtype, vmem_limit):
    """Core fused call on pre-padded operands."""
    B_p, D_in_p = x_p.shape
    H_p = w1_p.shape[1]
    D_out_p = w2_p.shape[1]

    kernel = functools.partial(_mlp_kernel, apply_softmax=apply_softmax)
    return pl.pallas_call(
        kernel,
        out_shape=jax.ShapeDtypeStruct((B_p, D_out_p), out_dtype),
        grid_spec=pltpu.PrefetchScalarGridSpec(
            num_scalar_prefetch=0,
            grid=(B_p // tb, H_p // th),
            in_specs=[
                # Activations stream per batch tile (constant across the H axis,
                # so they are not re-fetched per H step).
                pl.BlockSpec((tb, D_in_p), lambda i, k: (i, 0)),
                # H-slices of the weights / fc1 bias stream along the k axis.
                pl.BlockSpec((D_in_p, th), lambda i, k: (0, k)),
                pl.BlockSpec((1, th), lambda i, k: (0, k)),
                pl.BlockSpec((th, D_out_p), lambda i, k: (k, 0)),
                # fc2 bias stays resident.
                pl.BlockSpec((1, D_out_p), lambda i, k: (0, 0)),
            ],
            out_specs=pl.BlockSpec((tb, D_out_p), lambda i, k: (i, 0)),
            scratch_shapes=[pltpu.VMEM((tb, D_out_p), jnp.float32)],
        ),
        compiler_params=pltpu.CompilerParams(
            dimension_semantics=("parallel", "arbitrary"),
            vmem_limit_bytes=vmem_limit,
        ),
    )(x_p, w1_p, b1_p, w2_p, b2_p)


def mlp_forward(x, w1, b1, w2, b2, apply_softmax=False, *,
                compute_dtype=jnp.bfloat16, out_dtype=None,
                block_batch=512, block_hidden=512):
    """Functional entry point.  x: (B, D_in); w1: (D_in, H); b1: (H,);
    w2: (H, D_out); b2: (D_out,).  Matmul operands in `compute_dtype`
    (bf16 default, f32 opt-in), accumulation/bias/softmax always f32."""
    B, D_in = x.shape
    H = w1.shape[1]
    D_out = w2.shape[1]
    out_dtype = x.dtype if out_dtype is None else out_dtype

    cd = jnp.dtype(compute_dtype)
    align = _sublane(cd)
    tb, B_p = _batch_tiling(B, block_batch, align)
    th, H_p = _hidden_tiling(H, block_hidden)
    D_in_p = _round_up(D_in, 128)
    D_out_p = _round_up(D_out, 128)

    x_p = _pad2d(x, B_p, D_in_p, cd)
    w1_p = _pad2d(w1, D_in_p, H_p, cd)
    b1_p = _pad2d(b1, 1, H_p, jnp.float32)
    w2_p = _pad2d(w2, H_p, D_out_p, cd)
    b2_p = _pad2d(b2, 1, D_out_p, jnp.float32)
    if apply_softmax and D_out_p > D_out:
        b2_p = b2_p.at[0, D_out:].set(-1e30)

    out_p = _mlp_pallas(x_p, w1_p, b1_p, w2_p, b2_p, tb=tb, th=th,
                        apply_softmax=apply_softmax, out_dtype=out_dtype,
                        vmem_limit=_vmem_limit_bytes())
    if out_p.shape == (B, D_out):
        return out_p
    return out_p[:B, :D_out]


class MultilayerPerceptron:
    """Module-style wrapper: weights are padded/cast once at construction so a
    forward call does no per-call weight padding round-trips through HBM."""

    def __init__(self, w1, b1, w2, b2, *, compute_dtype=jnp.bfloat16,
                 block_batch=512, block_hidden=512):
        self.input_dim, self.hidden_dim = w1.shape
        self.output_dim = w2.shape[1]
        self.compute_dtype = jnp.dtype(compute_dtype)
        self.block_batch = block_batch
        self._align = _sublane(self.compute_dtype)
        self._th, H_p = _hidden_tiling(self.hidden_dim, block_hidden)
        self._d_in_p = _round_up(self.input_dim, 128)
        self._d_out_p = _round_up(self.output_dim, 128)
        self._vmem_limit = _vmem_limit_bytes()

        self.w1_p = _pad2d(w1, self._d_in_p, H_p, self.compute_dtype)
        self.b1_p = _pad2d(b1, 1, H_p, jnp.float32)
        self.w2_p = _pad2d(w2, H_p, self._d_out_p, self.compute_dtype)
        self.b2_p = _pad2d(b2, 1, self._d_out_p, jnp.float32)
        # Softmax variant: padded logit lanes pushed to -1e30 (gated on softmax
        # only, so the no-softmax path never sees huge-negative values).
        self.b2_p_sm = (self.b2_p if self._d_out_p == self.output_dim
                        else self.b2_p.at[0, self.output_dim:].set(-1e30))

    def __call__(self, x_in, apply_softmax=False, *, out_dtype=None):
        B = x_in.shape[0]
        out_dtype = x_in.dtype if out_dtype is None else out_dtype
        tb, B_p = _batch_tiling(B, self.block_batch, self._align)
        x_p = _pad2d(x_in, B_p, self._d_in_p, self.compute_dtype)
        b2 = self.b2_p_sm if apply_softmax else self.b2_p
        out_p = _mlp_pallas(x_p, self.w1_p, self.b1_p, self.w2_p, b2,
                            tb=tb, th=self._th, apply_softmax=apply_softmax,
                            out_dtype=out_dtype, vmem_limit=self._vmem_limit)
        if out_p.shape == (B, self.output_dim):
            return out_p
        return out_p[:B, :self.output_dim]


def _ref_forward(x, w1, b1, w2, b2, apply_softmax=False):
    h = jnp.maximum(x @ w1 + b1, 0.0)
    out = h @ w2 + b2
    if apply_softmax:
        out = jax.nn.softmax(out, axis=1)
    return out


def _init_linear(key, fan_in, fan_out):
    # Deterministic init mimicking PyTorch nn.Linear: U(-1/sqrt(fan_in), +1/sqrt(fan_in))
    kw, kb = jax.random.split(key)
    bound = 1.0 / jnp.sqrt(fan_in)
    w = jax.random.uniform(kw, (fan_in, fan_out), jnp.float32, -bound, bound)
    b = jax.random.uniform(kb, (fan_out,), jnp.float32, -bound, bound)
    return w, b


if __name__ == "__main__":
    batch, input_dim, hidden_dim, output_dim = 2, 16, 32, 8

    key = jax.random.PRNGKey(0)
    kx, k1, k2 = jax.random.split(key, 3)
    x = jax.random.normal(kx, (batch, input_dim), jnp.float32)
    w1, b1 = _init_linear(k1, input_dim, hidden_dim)
    w2, b2 = _init_linear(k2, hidden_dim, output_dim)

    ref = _ref_forward(x, w1, b1, w2, b2, apply_softmax=False)
    ref_sm = _ref_forward(x, w1, b1, w2, b2, apply_softmax=True)

    # --- f32 operand path (opt-in accuracy path): tight parity ----------------
    out = jax.block_until_ready(
        mlp_forward(x, w1, b1, w2, b2, apply_softmax=False,
                    compute_dtype=jnp.float32))
    assert out.shape == (batch, output_dim)
    assert jnp.allclose(out, ref, atol=1e-5, rtol=1e-5)

    out_sm = jax.block_until_ready(
        mlp_forward(x, w1, b1, w2, b2, apply_softmax=True,
                    compute_dtype=jnp.float32))
    assert jnp.allclose(out_sm, ref_sm, atol=2e-3, rtol=2e-3)

    # --- default bf16-operand path via the module wrapper (pre-padded weights) -
    mlp = MultilayerPerceptron(w1, b1, w2, b2)          # compute_dtype=bf16 default
    out_bf = jax.block_until_ready(mlp(x, apply_softmax=False))
    assert out_bf.shape == (batch, output_dim) and out_bf.dtype == x.dtype
    assert jnp.allclose(out_bf, ref, atol=5e-2, rtol=5e-2)
    out_bf_sm = jax.block_until_ready(mlp(x, apply_softmax=True))
    assert jnp.allclose(out_bf_sm, ref_sm, atol=5e-2, rtol=5e-2)

    # --- multi-tile correctness (several batch tiles x several hidden tiles) ---
    B2, D2, H2, O2 = 48, 200, 300, 10
    kk = jax.random.split(jax.random.PRNGKey(1), 3)
    x2 = jax.random.normal(kk[0], (B2, D2), jnp.float32)
    w1b, b1b = _init_linear(kk[1], D2, H2)
    w2b, b2b = _init_linear(kk[2], H2, O2)
    out2 = jax.block_until_ready(
        mlp_forward(x2, w1b, b1b, w2b, b2b, apply_softmax=True,
                    compute_dtype=jnp.float32, block_batch=16, block_hidden=128))
    ref2 = _ref_forward(x2, w1b, b1b, w2b, b2b, apply_softmax=True)
    assert out2.shape == (B2, O2)
    assert jnp.allclose(out2, ref2, atol=2e-3, rtol=2e-3)

    print("KERNEL_OK")
</pallas_src>

<mosaic_0001>
module attributes {stable_mosaic.version = 11 : i64} {
  func.func @_mlp_kernel(%arg0: i32, %arg1: i32, %arg2: memref<8x128xf32, #tpu.memory_space<vmem>>, %arg3: memref<128x128xf32, #tpu.memory_space<vmem>>, %arg4: memref<1x128xf32, #tpu.memory_space<vmem>>, %arg5: memref<128x128xf32, #tpu.memory_space<vmem>>, %arg6: memref<1x128xf32, #tpu.memory_space<vmem>>, %arg7: memref<8x128xf32, #tpu.memory_space<vmem>>, %arg8: memref<8x128xf32, #tpu.memory_space<vmem>>) attributes {dimension_semantics = [#tpu.dimension_semantics<parallel>, #tpu.dimension_semantics<arbitrary>], iteration_bounds = array<i64: 1, 1>, scalar_prefetch = 0 : i64, scratch_operands = 1 : i64, tpu.core_type = #tpu.core_type<tc>, window_params = [{transform_indices = @transform_0, window_bounds = array<i64: 8, 128>}, {transform_indices = @transform_1, window_bounds = array<i64: 128, 128>}, {transform_indices = @transform_2, window_bounds = array<i64: 1, 128>}, {transform_indices = @transform_3, window_bounds = array<i64: 128, 128>}, {pipeline_mode = #tpu.pipeline_mode<synchronous>, transform_indices = @transform_4, window_bounds = array<i64: 1, 128>}, {transform_indices = @transform_5, window_bounds = array<i64: 8, 128>}]} {
    %c0_i32 = arith.constant 0 : i32
    %0 = arith.cmpi eq, %arg1, %c0_i32 : i32
    %1 = arith.extui %0 : i1 to i32
    %c0_i32_0 = arith.constant 0 : i32
    %2 = arith.cmpi ne, %1, %c0_i32_0 : i32
    scf.if %2 {
      %cst_16 = arith.constant 0.000000e+00 : f32
      %19 = vector.broadcast %cst_16 : f32 to vector<8x128xf32>
      %c0_17 = arith.constant 0 : index
      %c0_18 = arith.constant 0 : index
      %20 = vector.load %arg8[%c0_17, %c0_18] : memref<8x128xf32, #tpu.memory_space<vmem>>, vector<8x128xf32>
      tpu.vector_store %arg8[%c0_17, %c0_18], %19 {strides = array<i32>} : memref<8x128xf32, #tpu.memory_space<vmem>>, vector<8x128xf32>,
    } else {
    }
    %c0 = arith.constant 0 : index
    %c0_1 = arith.constant 0 : index
    %3 = vector.load %arg2[%c0, %c0_1] : memref<8x128xf32, #tpu.memory_space<vmem>>, vector<8x128xf32>
    %c0_2 = arith.constant 0 : index
    %c0_3 = arith.constant 0 : index
    %4 = vector.load %arg3[%c0_2, %c0_3] : memref<128x128xf32, #tpu.memory_space<vmem>>, vector<128x128xf32>
    %cst = arith.constant dense<0.000000e+00> : vector<8x128xf32>
    %5 = tpu.matmul %3, %4, %cst {dimension_numbers = #tpu.dot_dimension_numbers<[1], [0], [0], [1], [0, 0, 1, 1], [], []>} : vector<8x128xf32>, vector<128x128xf32>, vector<8x128xf32> -> vector<8x128xf32>
    %c0_4 = arith.constant 0 : index
    %c0_5 = arith.constant 0 : index
    %6 = vector.load %arg4[%c0_4, %c0_5] : memref<1x128xf32, #tpu.memory_space<vmem>>, vector<1x128xf32>
    %7 = vector.broadcast %6 : vector<1x128xf32> to vector<8x128xf32>
    %8 = arith.addf %5, %7 : vector<8x128xf32>
    %cst_6 = arith.constant 0.000000e+00 : f32
    %9 = vector.broadcast %cst_6 : f32 to vector<8x128xf32>
    %10 = arith.maximumf %8, %9 : vector<8x128xf32>
    %c0_7 = arith.constant 0 : index
    %c0_8 = arith.constant 0 : index
    %11 = vector.load %arg8[%c0_7, %c0_8] : memref<8x128xf32, #tpu.memory_space<vmem>>, vector<8x128xf32>
    %c0_9 = arith.constant 0 : index
    %c0_10 = arith.constant 0 : index
    %12 = vector.load %arg5[%c0_9, %c0_10] : memref<128x128xf32, #tpu.memory_space<vmem>>, vector<128x128xf32>
    %cst_11 = arith.constant dense<0.000000e+00> : vector<8x128xf32>
    %13 = tpu.matmul %10, %12, %cst_11 {dimension_numbers = #tpu.dot_dimension_numbers<[1], [0], [0], [1], [0, 0, 1, 1], [], []>} : vector<8x128xf32>, vector<128x128xf32>, vector<8x128xf32> -> vector<8x128xf32>
    %14 = arith.addf %11, %13 : vector<8x128xf32>
    %c0_12 = arith.constant 0 : index
    %c0_13 = arith.constant 0 : index
    %15 = vector.load %arg8[%c0_12, %c0_13] : memref<8x128xf32, #tpu.memory_space<vmem>>, vector<8x128xf32>
    tpu.vector_store %arg8[%c0_12, %c0_13], %14 {strides = array<i32>} : memref<8x128xf32, #tpu.memory_space<vmem>>, vector<8x128xf32>,
    %c0_i32_14 = arith.constant 0 : i32
    %16 = arith.cmpi eq, %arg1, %c0_i32_14 : i32
    %17 = arith.extui %16 : i1 to i32
    %c0_i32_15 = arith.constant 0 : i32
    %18 = arith.cmpi ne, %17, %c0_i32_15 : i32
    scf.if %18 {
      %c0_16 = arith.constant 0 : index
      %c0_17 = arith.constant 0 : index
      %19 = vector.load %arg8[%c0_16, %c0_17] : memref<8x128xf32, #tpu.memory_space<vmem>>, vector<8x128xf32>
      %c0_18 = arith.constant 0 : index
      %c0_19 = arith.constant 0 : index
      %20 = vector.load %arg6[%c0_18, %c0_19] : memref<1x128xf32, #tpu.memory_space<vmem>>, vector<1x128xf32>
      %21 = vector.broadcast %20 : vector<1x128xf32> to vector<8x128xf32>
      %22 = arith.addf %19, %21 : vector<8x128xf32>
      %c0_20 = arith.constant 0 : index
      %c0_21 = arith.constant 0 : index
      %23 = vector.load %arg7[%c0_20, %c0_21] : memref<8x128xf32, #tpu.memory_space<vmem>>, vector<8x128xf32>
      tpu.vector_store %arg7[%c0_20, %c0_21], %22 {strides = array<i32>} : memref<8x128xf32, #tpu.memory_space<vmem>>, vector<8x128xf32>,
    } else {
    }
    return
  }
  func.func @transform_0(%arg0: i32, %arg1: i32) -> (i32, i32) {
    %c0_i32 = arith.constant 0 : i32
    %c0_i32_0 = arith.constant 0 : i32
    return %arg0, %c0_i32 : i32, i32
  }
  func.func @transform_1(%arg0: i32, %arg1: i32) -> (i32, i32) {
    %c0_i32 = arith.constant 0 : i32
    %c0_i32_0 = arith.constant 0 : i32
    return %c0_i32, %arg1 : i32, i32
  }
  func.func @transform_2(%arg0: i32, %arg1: i32) -> (i32, i32) {
    %c0_i32 = arith.constant 0 : i32
    %c0_i32_0 = arith.constant 0 : i32
    return %c0_i32, %arg1 : i32, i32
  }
  func.func @transform_3(%arg0: i32, %arg1: i32) -> (i32, i32) {
    %c0_i32 = arith.constant 0 : i32
    %c0_i32_0 = arith.constant 0 : i32
    return %arg1, %c0_i32 : i32, i32
  }
  func.func @transform_4(%arg0: i32, %arg1: i32) -> (i32, i32) {
    %c0_i32 = arith.constant 0 : i32
    %c0_i32_0 = arith.constant 0 : i32
    %c0_i32_1 = arith.constant 0 : i32
    return %c0_i32, %c0_i32_0 : i32, i32
  }
  func.func @transform_5(%arg0: i32, %arg1: i32) -> (i32, i32) {
    %c0_i32 = arith.constant 0 : i32
    %c0_i32_0 = arith.constant 0 : i32
    return %arg0, %c0_i32 : i32, i32
  }
}

</mosaic_0001>

<llo_original>
// kernel: tpu_custom_call.1
$region0: #{tpu_custom_call.1}
  #allocation0 [shape = 'u32[]', space=smem, size = 0x4, offset = 0x4, fixed_abs, tag = 'smem constant byte address 0x4 - core index']
  #allocation1 [shape = 'u32[72,128]{1,0:T(1,128)}', space=vmem, size = 0x9000, scoped, tag = 'internal scratch']
  #allocation2 [shape = 'f32[8,128]{1,0:T(8,128)}', space=vmem, size = 0x1000, scoped, tag = 'scratch operand']
  %s0 = inlined_call_operand.hbm [shape: f32[8,128], index: 0, kind: input, shape index: {}]
  %s1 = inlined_call_operand.hbm [shape: f32[128,128], index: 1, kind: input, shape index: {}]
  %s2 = inlined_call_operand.vmem [shape: f32[1,128], index: 2, kind: input, shape index: {}]
  %s3 = inlined_call_operand.hbm [shape: f32[128,128], index: 3, kind: input, shape index: {}]
  %s4 = inlined_call_operand.vmem [shape: f32[1,128], index: 4, kind: input, shape index: {}]
  %s5 = inlined_call_operand.hbm [shape: f32[8,128], index: 5, kind: output, shape index: {}]
  %s6 = sld [smem:[#allocation0]]
  $region50: #{tpu_custom_call.1} parent=0
    _
  %s8 = ssub.s32 1, %s6
  %s9 = scalar_select 0, %s8, %s6
  $region1: #{tpu_custom_call.1} parent=0
    #allocation3 [shape = 'u8[4096]{0}', space=vmem, size = 0x1000, scoped, tag = 'input window, operand 0, single buffered']
    #allocation4 [shape = 's32[1]{0}', space=sflag, size = 0x4, scoped, tag = 'scoped memory for tpu_custom_call.1']
    #allocation5 [shape = 's32[1]{0}', space=sflag, size = 0x4, scoped, tag = 'scoped memory for tpu_custom_call.1']
    #allocation6 [shape = 'u8[65536]{0}', space=vmem, size = 0x10000, scoped, tag = 'input window, operand 1, single buffered']
    #allocation7 [shape = 's32[1]{0}', space=sflag, size = 0x4, scoped, tag = 'scoped memory for tpu_custom_call.1']
    #allocation8 [shape = 'u8[65536]{0}', space=vmem, size = 0x10000, scoped, tag = 'input window, operand 3, single buffered']
    #allocation9 [shape = 'u8[4096]{0}', space=vmem, size = 0x1000, scoped, tag = 'output window, operand 0, single buffered']
    %10 = vsyncpa [#allocation4], 0
    %11 = vsyncpa [#allocation7], 0
    %12 = vsyncpa [#allocation5], 0
    // Predicated region
    $region2: #{tpu_custom_call.1} parent=1 // pred_check
      _
    $region3: #{tpu_custom_call.1} parent=1 // pred_check_branch
      %14 = sbr.rel (0) target = $region5
    $region4: #{tpu_custom_call.1} parent=1 // pred_region
      %16 = vsyncadd [#allocation4], 0
      %s18 = sshll.u32 %s0, 4
      %s19 = int_to_ptr.hbm [resolvable:$true] %s18
      %s20 = sshll.u32 [#allocation3], 4
      %s21 = int_to_ptr.vmem [resolvable:$true] %s20
      %23 = dma.hbm_to_vmem [thread:$0]  %s19, 128, %s21, [#allocation4]
    $region5: #{tpu_custom_call.1} parent=1 // pred_fallthru
      _
    // Predicated region
    $region6: #{tpu_custom_call.1} parent=1 // pred_check
      _
    $region7: #{tpu_custom_call.1} parent=1 // pred_check_branch
      %25 = sbr.rel (0) target = $region9
    $region8: #{tpu_custom_call.1} parent=1 // pred_region
      %27 = vsyncadd [#allocation7], 0
      %s28 = sshll.u32 %s1, 4
      %s29 = int_to_ptr.hbm [resolvable:$true] %s28
      %s30 = sshll.u32 [#allocation6], 4
      %s31 = int_to_ptr.vmem [resolvable:$true] %s30
      %36 = dma.hbm_to_vmem [thread:$0]  %s29, 2048, %s31, [#allocation7], 128, 128, 8
    $region9: #{tpu_custom_call.1} parent=1 // pred_fallthru
      _
    // Predicated region
    $region10: #{tpu_custom_call.1} parent=1 // pred_check
      _
    $region11: #{tpu_custom_call.1} parent=1 // pred_check_branch
      %38 = sbr.rel (0) target = $region13
    $region12: #{tpu_custom_call.1} parent=1 // pred_region
      _
    $region13: #{tpu_custom_call.1} parent=1 // pred_fallthru
      _
    // Predicated region
    $region14: #{tpu_custom_call.1} parent=1 // pred_check
      _
    $region15: #{tpu_custom_call.1} parent=1 // pred_check_branch
      %40 = sbr.rel (0) target = $region17
    $region16: #{tpu_custom_call.1} parent=1 // pred_region
      %42 = vsyncadd [#allocation7], 0
      %s43 = sshll.u32 %s3, 4
      %s44 = int_to_ptr.hbm [resolvable:$true] %s43
      %s45 = sshll.u32 [#allocation8], 4
      %s46 = int_to_ptr.vmem [resolvable:$true] %s45
      %51 = dma.hbm_to_vmem [thread:$0]  %s44, 2048, %s46, [#allocation7], 128, 128, 8
    $region17: #{tpu_custom_call.1} parent=1 // pred_fallthru
      _
    // Predicated region
    $region18: #{tpu_custom_call.1} parent=1 // pred_check
      _
    $region19: #{tpu_custom_call.1} parent=1 // pred_check_branch
      %53 = sbr.rel (0) target = $region21
    $region20: #{tpu_custom_call.1} parent=1 // pred_region
      _
    $region21: #{tpu_custom_call.1} parent=1 // pred_fallthru
      _
    // Predicated region
    $region22: #{tpu_custom_call.1} parent=1 // pred_check
      _
    $region23: #{tpu_custom_call.1} parent=1 // pred_check_branch
      %55 = sbr.rel (0) target = $region25
    $region24: #{tpu_custom_call.1} parent=1 // pred_region
      %57 = dma.done [#allocation4], 128
    $region25: #{tpu_custom_call.1} parent=1 // pred_fallthru
      _
    // Predicated region
    $region26: #{tpu_custom_call.1} parent=1 // pred_check
      _
    $region27: #{tpu_custom_call.1} parent=1 // pred_check_branch
      %59 = sbr.rel (0) target = $region29
    $region28: #{tpu_custom_call.1} parent=1 // pred_region
      %61 = dma.done [#allocation7], 2048
    $region29: #{tpu_custom_call.1} parent=1 // pred_fallthru
      _
    // Predicated region
    $region30: #{tpu_custom_call.1} parent=1 // pred_check
      _
    $region31: #{tpu_custom_call.1} parent=1 // pred_check_branch
      %63 = sbr.rel (0) target = $region33
    $region32: #{tpu_custom_call.1} parent=1 // pred_region
      %65 = dma.done [#allocation7], 2048
    $region33: #{tpu_custom_call.1} parent=1 // pred_fallthru
      _
    %p66 = scmp.eq.s32.totalorder 0, 0
    // Predicated region
    $region34: #{tpu_custom_call.1} parent=1 // pred_check
      %p67 = pneg %p66
    $region35: #{tpu_custom_call.1} parent=1 // pred_check_branch
      %69 = sbr.rel (%p67) target = $region37
    $region36: #{tpu_custom_call.1} parent=1 // pred_region
      %70 = vst [vmem:[#allocation2] sm:$0xff] 0.0
    $region37: #{tpu_custom_call.1} parent=1 // pred_fallthru
      _
    %v71 = vld [vmem:[#allocation3] sm:$0xff]
    %v72 = vld [vmem:[#allocation6] sm:$0xff]
    %v73 = vld [vmem:[#allocation6 + $0x8] sm:$0xff]
    %v74 = vld [vmem:[#allocation6 + $0x10] sm:$0xff]
    %v75 = vld [vmem:[#allocation6 + $0x18] sm:$0xff]
    %v76 = vld [vmem:[#allocation6 + $0x20] sm:$0xff]
    %v77 = vld [vmem:[#allocation6 + $0x28] sm:$0xff]
    %v78 = vld [vmem:[#allocation6 + $0x30] sm:$0xff]
    %v79 = vld [vmem:[#allocation6 + $0x38] sm:$0xff]
    %v80 = vld [vmem:[#allocation6 + $0x40] sm:$0xff]
    %v81 = vld [vmem:[#allocation6 + $0x48] sm:$0xff]
    %v82 = vld [vmem:[#allocation6 + $0x50] sm:$0xff]
    %v83 = vld [vmem:[#allocation6 + $0x58] sm:$0xff]
    %v84 = vld [vmem:[#allocation6 + $0x60] sm:$0xff]
    %v85 = vld [vmem:[#allocation6 + $0x68] sm:$0xff]
    %v86 = vld [vmem:[#allocation6 + $0x70] sm:$0xff]
    %v87 = vld [vmem:[#allocation6 + $0x78] sm:$0xff]
    %v88 = vld [vmem:[%s2] sm:$0x1]
    %v90 = vperm.slane %v88, 0
    %92 = vmatpush.msra.mxu0 %v87
    %93 = vmatpush.msra.mxu0 %v86
    %94 = vmatpush.msra.mxu0 %v85
    %95 = vmatpush.msra.mxu0 %v84
    %96 = vmatpush.msra.mxu0 %v83
    %97 = vmatpush.msra.mxu0 %v82
    %98 = vmatpush.msra.mxu0 %v81
    %99 = vmatpush.msra.mxu0 %v80
    %100 = vmatpush.msra.mxu0 %v79
    %101 = vmatpush.msra.mxu0 %v78
    %102 = vmatpush.msra.mxu0 %v77
    %103 = vmatpush.msra.mxu0 %v76
    %104 = vmatpush.msra.mxu0 %v75
    %105 = vmatpush.msra.mxu0 %v74
    %106 = vmatpush.msra.mxu0 %v73
    %107 = vmatpush.msra.mxu0 %v72
    %108 = vmatmul.f32.gmra.mxu0 %v71
    %v109 = vpop.f32.mrf.mxu0
    %v110 = vadd.f32 %v90, %v109
    %111 = vdwg.mxu0
    %v112 = vmax.f32 %v110, 0.0
    %v113 = vld [vmem:[#allocation2] sm:$0xff]
    %v114 = vld [vmem:[#allocation8] sm:$0xff]
    %v115 = vld [vmem:[#allocation8 + $0x8] sm:$0xff]
    %v116 = vld [vmem:[#allocation8 + $0x10] sm:$0xff]
    %v117 = vld [vmem:[#allocation8 + $0x18] sm:$0xff]
    %v118 = vld [vmem:[#allocation8 + $0x20] sm:$0xff]
    %v119 = vld [vmem:[#allocation8 + $0x28] sm:$0xff]
    %v120 = vld [vmem:[#allocation8 + $0x30] sm:$0xff]
    %v121 = vld [vmem:[#allocation8 + $0x38] sm:$0xff]
    %v122 = vld [vmem:[#allocation8 + $0x40] sm:$0xff]
    %v123 = vld [vmem:[#allocation8 + $0x48] sm:$0xff]
    %v124 = vld [vmem:[#allocation8 + $0x50] sm:$0xff]
    %v125 = vld [vmem:[#allocation8 + $0x58] sm:$0xff]
    %v126 = vld [vmem:[#allocation8 + $0x60] sm:$0xff]
    %v127 = vld [vmem:[#allocation8 + $0x68] sm:$0xff]
    %v128 = vld [vmem:[#allocation8 + $0x70] sm:$0xff]
    %v129 = vld [vmem:[#allocation8 + $0x78] sm:$0xff]
    %130 = vmatpush.msra.mxu0 %v129
    %131 = vmatpush.msra.mxu0 %v128
    %132 = vmatpush.msra.mxu0 %v127
    %133 = vmatpush.msra.mxu0 %v126
    %134 = vmatpush.msra.mxu0 %v125
    %135 = vmatpush.msra.mxu0 %v124
    %136 = vmatpush.msra.mxu0 %v123
    %137 = vmatpush.msra.mxu0 %v122
    %138 = vmatpush.msra.mxu0 %v121
    %139 = vmatpush.msra.mxu0 %v120
    %140 = vmatpush.msra.mxu0 %v119
    %141 = vmatpush.msra.mxu0 %v118
    %142 = vmatpush.msra.mxu0 %v117
    %143 = vmatpush.msra.mxu0 %v116
    %144 = vmatpush.msra.mxu0 %v115
    %145 = vmatpush.msra.mxu0 %v114
    %146 = vmatmul.f32.gmra.mxu0 %v112
    %v147 = vpop.f32.mrf.mxu0
    %v148 = vadd.f32 0.0, %v147
    %149 = vdwg.mxu0
    %v150 = vadd.f32 %v113, %v148
    %151 = vst [vmem:[#allocation2] sm:$0xff] %v150
    // Predicated region
    $region38: #{tpu_custom_call.1} parent=1 // pred_check
      %p152 = pneg %p66
    $region39: #{tpu_custom_call.1} parent=1 // pred_check_branch
      %154 = sbr.rel (%p152) target = $region41
    $region40: #{tpu_custom_call.1} parent=1 // pred_region
      %v155 = vld [vmem:[#allocation2] sm:$0xff]
      %v156 = vld [vmem:[%s4] sm:$0x1]
      %v158 = vperm.slane %v156, 0
      %v160 = vadd.f32 %v155, %v158
      %161 = vst [vmem:[#allocation9] sm:$0xff] %v160
    $region41: #{tpu_custom_call.1} parent=1 // pred_fallthru
      _
    // Predicated region
    $region42: #{tpu_custom_call.1} parent=1 // pred_check
      _
    $region43: #{tpu_custom_call.1} parent=1 // pred_check_branch
      %163 = sbr.rel (0) target = $region45
    $region44: #{tpu_custom_call.1} parent=1 // pred_region
      %165 = vsyncadd [#allocation5], 0
      %s167 = sshll.u32 [#allocation9], 4
      %s168 = int_to_ptr.vmem [resolvable:$true] %s167
      %s169 = sshll.u32 %s5, 4
      %s170 = int_to_ptr.hbm [resolvable:$true] %s169
      %172 = dma.vmem_to_hbm [thread:$0]  %s168, 128, %s170, [#allocation5]
    $region45: #{tpu_custom_call.1} parent=1 // pred_fallthru
      _
    // Predicated region
    $region46: #{tpu_custom_call.1} parent=1 // pred_check
      _
    $region47: #{tpu_custom_call.1} parent=1 // pred_check_branch
      %174 = sbr.rel (0) target = $region49
    $region48: #{tpu_custom_call.1} parent=1 // pred_region
      %176 = dma.done [#allocation5], 128
    $region49: #{tpu_custom_call.1} parent=1 // pred_fallthru
      _
    %177 = vsyncpa [#allocation4], 1
    %178 = vsyncpa [#allocation7], 1
    %179 = vsyncpa [#allocation5], 1

</llo_original>
